<compile_context>
chip_gen: v7x
topology: tpu7x:2x2x1
jax: 0.10.0
libtpu: 0.0.40
codegen_flags: <defaults>
</compile_context>

<pallas_src>
import jax
import jax.numpy as jnp
from jax.experimental import pallas as pl
from jax.experimental.pallas import tpu as pltpu


def _round_up(x, m):
    return ((x + m - 1) // m) * m


def _device_flags():
    kind = ""
    try:
        kind = jax.devices()[0].device_kind.lower()
    except Exception:
        pass
    is_v7 = "v7" in kind
    bf16_vpu = ("v6" in kind) or is_v7   # v6e/v7x VPU handles bf16; v5e does not
    return is_v7, bf16_vpu


def _make_vnet_kernel(bf16_epilogue):
    def _vnet_kernel(x_ref, w1_ref, b1_ref, w2_ref, b2_ref, w3_ref, b3_ref, out_ref):
        # x: [TB, S] (f32 or bf16), w1: [S, H] bf16, b1: [1, H] f32,
        # w2: [H, H] bf16, b2: [1, H] f32, w3: [1, H] f32 (fc3 weight as a row),
        # b3: [1, 1] f32 in SMEM, out: [1, TB] f32 (lane-dense row).
        x = x_ref[...].astype(jnp.bfloat16)     # no-op if the producer supplies bf16

        acc1 = jnp.dot(x, w1_ref[...], preferred_element_type=jnp.float32)
        if bf16_epilogue:
            # v6e/v7x: bf16 VPU -> bias-add + ReLU feeding fc2 in bf16 (half vreg traffic).
            h1 = jnp.maximum(acc1.astype(jnp.bfloat16) + b1_ref[...].astype(jnp.bfloat16), 0)
        else:
            # v5e: no bf16 VALU -> f32 add/relu, single cast before the MXU.
            h1 = jnp.maximum(acc1 + b1_ref[...], 0.0).astype(jnp.bfloat16)

        acc2 = jnp.dot(h1, w2_ref[...], preferred_element_type=jnp.float32)
        h2 = jnp.maximum(acc2 + b2_ref[...], 0.0)          # f32 into the fc3 reduce

        # fc3 (out_features == 1): VPU multiply + lane reduce instead of an N=1 MXU
        # matmul; write a lane-dense [1, TB] row (unmasked vst).
        v = jnp.sum(h2 * w3_ref[...], axis=-1) + b3_ref[0, 0]
        out_ref[...] = v[None, :].astype(out_ref.dtype)

    return _vnet_kernel


def _choose_tiling(B, S, H, is_v7, max_tile_rows=None):
    """Pick the batch tile from a generation-aware VMEM budget."""
    budget = (40 << 20) if is_v7 else (80 << 20)   # v7x: 64 MiB physical; v5e/v6e: 128 MiB

    # Per-batch-row VMEM bytes, counting lane padding of narrow dims to 128:
    # x tile double-buffered f32 + one bf16 copy, h1/h2 f32 + bf16 copies.
    lanes_x = _round_up(max(S, 1), 128)
    lanes_h = _round_up(max(H, 1), 128)
    per_row = 2 * lanes_x * 4 + lanes_x * 2 + 2 * lanes_h * 4 + 2 * lanes_h * 2

    tb_cap = max(128, (budget // per_row) // 128 * 128)
    tb_cap = min(tb_cap, 16384)                    # diminishing returns past ~16K rows
    if max_tile_rows is not None:
        tb_cap = max(8, min(tb_cap, max_tile_rows))

    num_tiles = max(1, pl.cdiv(B, tb_cap))
    if is_v7 and num_tiles < 2 and B >= 4096:
        num_tiles = 2                              # keep both v7x TensorCores busy
    if num_tiles == 1:
        tb = _round_up(B, 8)                       # single tile, minimal padding
    else:
        # Balance tiles and clamp padding waste to < 128 rows per tile.
        tb = _round_up(pl.cdiv(B, num_tiles), 128)
    b_pad = tb * num_tiles
    return tb, num_tiles, b_pad, budget


def prepare_params(params):
    """Cast/reshape weights once (idempotent); reuse the result across forward calls."""
    if params.get("prepared", False):
        return params
    H = params["w1"].shape[1]
    return {
        "prepared": True,
        "w1": params["w1"].astype(jnp.bfloat16),
        "b1": params["b1"].reshape(1, H).astype(jnp.float32),
        "w2": params["w2"].astype(jnp.bfloat16),
        "b2": params["b2"].reshape(1, H).astype(jnp.float32),
        "w3": params["w3"].reshape(1, H).astype(jnp.float32),   # fc3 weight as a row
        "b3": params["b3"].reshape(1, 1).astype(jnp.float32),   # SMEM scalar
    }


def v_net_forward(state, params, *, max_tile_rows=None):
    """state: [B, state_dim] float32 or bfloat16. Returns [B, 1] float32."""
    params = prepare_params(params)
    B, S = state.shape
    H = params["w1"].shape[1]

    is_v7, bf16_vpu = _device_flags()
    tb, num_tiles, b_pad, budget = _choose_tiling(B, S, H, is_v7, max_tile_rows)

    if b_pad != B:
        state = jnp.pad(state, ((0, b_pad - B), (0, 0)))

    out = pl.pallas_call(
        _make_vnet_kernel(bf16_vpu),
        out_shape=jax.ShapeDtypeStruct((1, b_pad), jnp.float32),
        grid=(num_tiles,),
        in_specs=[
            pl.BlockSpec((tb, S), lambda i: (i, 0)),            # x: batch-tiled, pipelined
            pl.BlockSpec((S, H), lambda i: (0, 0)),             # w1: resident
            pl.BlockSpec((1, H), lambda i: (0, 0)),             # b1
            pl.BlockSpec((H, H), lambda i: (0, 0)),             # w2
            pl.BlockSpec((1, H), lambda i: (0, 0)),             # b2
            pl.BlockSpec((1, H), lambda i: (0, 0)),             # w3 row
            pl.BlockSpec(memory_space=pltpu.MemorySpace.SMEM),  # b3 scalar
        ],
        out_specs=pl.BlockSpec((1, tb), lambda i: (0, i)),      # lane-dense output row
        compiler_params=pltpu.CompilerParams(
            dimension_semantics=("parallel",),                  # megacore on v7x
            vmem_limit_bytes=int(budget + (8 << 20)),           # v5e default is only 16 MiB
        ),
    )(state, params["w1"], params["b1"], params["w2"], params["b2"],
      params["w3"], params["b3"])

    return out.reshape(b_pad, 1)[:B]


def init_params(key, state_dim, hidden_dim):
    """nn.Linear-style init (uniform +/- 1/sqrt(fan_in)); weights stored [in, out]."""
    k1, k2, k3, k4, k5, k6 = jax.random.split(key, 6)

    def lin(kw, kb, fan_in, fan_out):
        bound = 1.0 / jnp.sqrt(jnp.float32(fan_in))
        w = jax.random.uniform(kw, (fan_in, fan_out), jnp.float32, -bound, bound)
        b = jax.random.uniform(kb, (1, fan_out), jnp.float32, -bound, bound)
        return w, b

    w1, b1 = lin(k1, k2, state_dim, hidden_dim)
    w2, b2 = lin(k3, k4, hidden_dim, hidden_dim)
    w3, b3 = lin(k5, k6, hidden_dim, 1)
    return {"w1": w1, "b1": b1, "w2": w2, "b2": b2, "w3": w3, "b3": b3}


def v_net_reference(state, params):
    """Pure-JAX f32 reference (raw params)."""
    h1 = jnp.maximum(state @ params["w1"] + params["b1"], 0.0)
    h2 = jnp.maximum(h1 @ params["w2"] + params["b2"], 0.0)
    return h2 @ params["w3"] + params["b3"]


if __name__ == "__main__":
    key = jax.random.PRNGKey(0)
    k_param, k_state = jax.random.split(key)

    batch, state_dim, hidden_dim = 8, 16, 32
    raw_params = init_params(k_param, state_dim, hidden_dim)
    params = prepare_params(raw_params)          # cast/reshape weights once
    state = jax.random.normal(k_state, (batch, state_dim), jnp.float32)

    out = jax.block_until_ready(v_net_forward(state, params))
    ref = v_net_reference(state, raw_params)
    assert out.shape == (batch, 1), out.shape
    # bf16 MXU inputs (f32 accumulation) -> loosened tolerance vs f32 reference.
    assert jnp.allclose(out, ref, atol=2e-2, rtol=2e-2), (out, ref)

    # Ragged batch: exercises the pad-to-tile / slice-back path.
    state2 = jax.random.normal(jax.random.PRNGKey(1), (5, state_dim), jnp.float32)
    out2 = jax.block_until_ready(v_net_forward(state2, params))
    ref2 = v_net_reference(state2, raw_params)
    assert out2.shape == (5, 1), out2.shape
    assert jnp.allclose(out2, ref2, atol=2e-2, rtol=2e-2), (out2, ref2)

    # Multi-tile grid path (tile size forced small so the test stays small).
    state3 = jax.random.normal(jax.random.PRNGKey(2), (300, state_dim), jnp.float32)
    out3 = jax.block_until_ready(v_net_forward(state3, params, max_tile_rows=128))
    ref3 = v_net_reference(state3, raw_params)
    assert out3.shape == (300, 1), out3.shape
    assert jnp.allclose(out3, ref3, atol=2e-2, rtol=2e-2), (out3, ref3)

    # bf16 state accepted directly (producer-side cast; no wrapper astype pass).
    out4 = jax.block_until_ready(v_net_forward(state.astype(jnp.bfloat16), params))
    assert out4.shape == (batch, 1), out4.shape
    assert jnp.allclose(out4, ref, atol=5e-2, rtol=5e-2), (out4, ref)

    print("KERNEL_OK")
</pallas_src>

<mosaic_0001>
module attributes {stable_mosaic.version = 11 : i64} {
  func.func @_vnet_kernel(%arg0: i32, %arg1: memref<8x16xf32, #tpu.memory_space<vmem>>, %arg2: memref<16x32xbf16, #tpu.memory_space<vmem>>, %arg3: memref<1x32xf32, #tpu.memory_space<vmem>>, %arg4: memref<32x32xbf16, #tpu.memory_space<vmem>>, %arg5: memref<1x32xf32, #tpu.memory_space<vmem>>, %arg6: memref<1x32xf32, #tpu.memory_space<vmem>>, %arg7: memref<1x1xf32, #tpu.memory_space<smem>>, %arg8: memref<1x8xf32, #tpu.memory_space<vmem>>) attributes {dimension_semantics = [#tpu.dimension_semantics<parallel>], iteration_bounds = array<i64: 1>, scalar_prefetch = 0 : i64, scratch_operands = 0 : i64, tpu.core_type = #tpu.core_type<tc>, window_params = [{transform_indices = @transform_0, window_bounds = array<i64: 8, 16>}, {pipeline_mode = #tpu.pipeline_mode<synchronous>, transform_indices = @transform_1, window_bounds = array<i64: 16, 32>}, {pipeline_mode = #tpu.pipeline_mode<synchronous>, transform_indices = @transform_2, window_bounds = array<i64: 1, 32>}, {pipeline_mode = #tpu.pipeline_mode<synchronous>, transform_indices = @transform_3, window_bounds = array<i64: 32, 32>}, {pipeline_mode = #tpu.pipeline_mode<synchronous>, transform_indices = @transform_4, window_bounds = array<i64: 1, 32>}, {pipeline_mode = #tpu.pipeline_mode<synchronous>, transform_indices = @transform_5, window_bounds = array<i64: 1, 32>}, {transform_indices = @transform_6, window_bounds = array<i64: 1, 1>}, {transform_indices = @transform_7, window_bounds = array<i64: 1, 8>}]} {
    %c0 = arith.constant 0 : index
    %c0_0 = arith.constant 0 : index
    %0 = vector.load %arg1[%c0, %c0_0] : memref<8x16xf32, #tpu.memory_space<vmem>>, vector<8x16xf32>
    %1 = arith.truncf %0 : vector<8x16xf32> to vector<8x16xbf16>
    %c0_1 = arith.constant 0 : index
    %c0_2 = arith.constant 0 : index
    %2 = vector.load %arg2[%c0_1, %c0_2] : memref<16x32xbf16, #tpu.memory_space<vmem>>, vector<16x32xbf16>
    %cst = arith.constant dense<0.000000e+00> : vector<8x32xf32>
    %3 = tpu.matmul %1, %2, %cst {dimension_numbers = #tpu.dot_dimension_numbers<[1], [0], [0], [1], [0, 0, 1, 1], [], []>} : vector<8x16xbf16>, vector<16x32xbf16>, vector<8x32xf32> -> vector<8x32xf32>
    %c0_3 = arith.constant 0 : index
    %c0_4 = arith.constant 0 : index
    %4 = vector.load %arg3[%c0_3, %c0_4] : memref<1x32xf32, #tpu.memory_space<vmem>>, vector<1x32xf32>
    %5 = vector.broadcast %4 : vector<1x32xf32> to vector<8x32xf32>
    %6 = arith.addf %3, %5 : vector<8x32xf32>
    %cst_5 = arith.constant 0.000000e+00 : f32
    %7 = vector.broadcast %cst_5 : f32 to vector<8x32xf32>
    %8 = arith.maximumf %6, %7 : vector<8x32xf32>
    %9 = arith.truncf %8 : vector<8x32xf32> to vector<8x32xbf16>
    %c0_6 = arith.constant 0 : index
    %c0_7 = arith.constant 0 : index
    %10 = vector.load %arg4[%c0_6, %c0_7] : memref<32x32xbf16, #tpu.memory_space<vmem>>, vector<32x32xbf16>
    %cst_8 = arith.constant dense<0.000000e+00> : vector<8x32xf32>
    %11 = tpu.matmul %9, %10, %cst_8 {dimension_numbers = #tpu.dot_dimension_numbers<[1], [0], [0], [1], [0, 0, 1, 1], [], []>} : vector<8x32xbf16>, vector<32x32xbf16>, vector<8x32xf32> -> vector<8x32xf32>
    %c0_9 = arith.constant 0 : index
    %c0_10 = arith.constant 0 : index
    %12 = vector.load %arg5[%c0_9, %c0_10] : memref<1x32xf32, #tpu.memory_space<vmem>>, vector<1x32xf32>
    %13 = vector.broadcast %12 : vector<1x32xf32> to vector<8x32xf32>
    %14 = arith.addf %11, %13 : vector<8x32xf32>
    %cst_11 = arith.constant 0.000000e+00 : f32
    %15 = vector.broadcast %cst_11 : f32 to vector<8x32xf32>
    %16 = arith.maximumf %14, %15 : vector<8x32xf32>
    %c0_12 = arith.constant 0 : index
    %c0_13 = arith.constant 0 : index
    %17 = vector.load %arg6[%c0_12, %c0_13] : memref<1x32xf32, #tpu.memory_space<vmem>>, vector<1x32xf32>
    %18 = vector.broadcast %17 : vector<1x32xf32> to vector<8x32xf32>
    %19 = arith.mulf %16, %18 : vector<8x32xf32>
    %cst_14 = arith.constant dense<0.000000e+00> : vector<8xf32>
    %20 = vector.multi_reduction <add>, %19, %cst_14 [1] : vector<8x32xf32> to vector<8xf32>
    %c0_15 = arith.constant 0 : index
    %c0_16 = arith.constant 0 : index
    %21 = memref.load %arg7[%c0_15, %c0_16] : memref<1x1xf32, #tpu.memory_space<smem>>
    %22 = vector.broadcast %21 : f32 to vector<8xf32>
    %23 = arith.addf %20, %22 : vector<8xf32>
    %24 = vector.shape_cast %23 : vector<8xf32> to vector<1x8xf32>
    %c0_17 = arith.constant 0 : index
    %c0_18 = arith.constant 0 : index
    %25 = vector.load %arg8[%c0_17, %c0_18] : memref<1x8xf32, #tpu.memory_space<vmem>>, vector<1x8xf32>
    tpu.vector_store %arg8[%c0_17, %c0_18], %24 {strides = array<i32>} : memref<1x8xf32, #tpu.memory_space<vmem>>, vector<1x8xf32>,
    return
  }
  func.func @transform_0(%arg0: i32) -> (i32, i32) {
    %c0_i32 = arith.constant 0 : i32
    %c0_i32_0 = arith.constant 0 : i32
    return %arg0, %c0_i32 : i32, i32
  }
  func.func @transform_1(%arg0: i32) -> (i32, i32) {
    %c0_i32 = arith.constant 0 : i32
    %c0_i32_0 = arith.constant 0 : i32
    %c0_i32_1 = arith.constant 0 : i32
    return %c0_i32, %c0_i32_0 : i32, i32
  }
  func.func @transform_2(%arg0: i32) -> (i32, i32) {
    %c0_i32 = arith.constant 0 : i32
    %c0_i32_0 = arith.constant 0 : i32
    %c0_i32_1 = arith.constant 0 : i32
    return %c0_i32, %c0_i32_0 : i32, i32
  }
  func.func @transform_3(%arg0: i32) -> (i32, i32) {
    %c0_i32 = arith.constant 0 : i32
    %c0_i32_0 = arith.constant 0 : i32
    %c0_i32_1 = arith.constant 0 : i32
    return %c0_i32, %c0_i32_0 : i32, i32
  }
  func.func @transform_4(%arg0: i32) -> (i32, i32) {
    %c0_i32 = arith.constant 0 : i32
    %c0_i32_0 = arith.constant 0 : i32
    %c0_i32_1 = arith.constant 0 : i32
    return %c0_i32, %c0_i32_0 : i32, i32
  }
  func.func @transform_5(%arg0: i32) -> (i32, i32) {
    %c0_i32 = arith.constant 0 : i32
    %c0_i32_0 = arith.constant 0 : i32
    %c0_i32_1 = arith.constant 0 : i32
    return %c0_i32, %c0_i32_0 : i32, i32
  }
  func.func @transform_6(%arg0: i32) -> (i32, i32) {
    %c0_i32 = arith.constant 0 : i32
    %c0_i32_0 = arith.constant 0 : i32
    %c0_i32_1 = arith.constant 0 : i32
    return %c0_i32, %c0_i32_0 : i32, i32
  }
  func.func @transform_7(%arg0: i32) -> (i32, i32) {
    %c0_i32 = arith.constant 0 : i32
    %c0_i32_0 = arith.constant 0 : i32
    return %c0_i32, %arg0 : i32, i32
  }
}

</mosaic_0001>

<llo_original>
// kernel: tpu_custom_call.1
$region0: #{tpu_custom_call.1}
  #allocation0 [shape = 'u32[]', space=smem, size = 0x4, offset = 0x4, fixed_abs, tag = 'smem constant byte address 0x4 - core index']
  #allocation1 [shape = 'u32[144,128]{1,0:T(1,128)}', space=vmem, size = 0x12000, scoped, tag = 'internal scratch']
  #allocation2 [shape = 'f32[1,1]{1,0:T(1,128)S(6)}', space=smem, size = 0x200, scoped, tag = 'scoped memory for tpu_custom_call.1']
  %s0 = inlined_call_operand.hbm [shape: f32[8,16], index: 0, kind: input, shape index: {}]
  %s1 = inlined_call_operand.hbm [shape: bf16[16,32], index: 1, kind: input, shape index: {}]
  %s2 = inlined_call_operand.hbm [shape: f32[1,32], index: 2, kind: input, shape index: {}]
  %s3 = inlined_call_operand.hbm [shape: bf16[32,32], index: 3, kind: input, shape index: {}]
  %s4 = inlined_call_operand.hbm [shape: f32[1,32], index: 4, kind: input, shape index: {}]
  %s5 = inlined_call_operand.hbm [shape: f32[1,32], index: 5, kind: input, shape index: {}]
  %s6 = inlined_call_operand.<no memory space> [shape: f32[1,1], index: 6, kind: input, shape index: {}]
  %s7 = inlined_call_operand.hbm [shape: f32[1,8], index: 7, kind: output, shape index: {}]
  %s8 = sld [smem:[#allocation0]]
  $region62: #{tpu_custom_call.1} parent=0
    _
  %s10 = ssub.s32 1, %s8
  %s11 = scalar_select 0, %s10, %s8
  %12 = sst [smem:[#allocation2]] %s6
  $region1: #{tpu_custom_call.1} parent=0
    #allocation3 [shape = 'u8[4096]{0}', space=vmem, size = 0x1000, scoped, tag = 'input window, operand 0, single buffered']
    #allocation4 [shape = 's32[1]{0}', space=sflag, size = 0x4, scoped, tag = 'scoped memory for tpu_custom_call.1']
    #allocation5 [shape = 's32[1]{0}', space=sflag, size = 0x4, scoped, tag = 'scoped memory for tpu_custom_call.1']
    #allocation6 [shape = 'u8[4096]{0}', space=vmem, size = 0x1000, scoped, tag = 'input window, operand 1, single buffered']
    #allocation7 [shape = 's32[1]{0}', space=sflag, size = 0x4, scoped, tag = 'scoped memory for tpu_custom_call.1']
    #allocation8 [shape = 'u8[512]{0}', space=vmem, size = 0x400, scoped, tag = 'input window, operand 2, single buffered']
    #allocation9 [shape = 'u8[8192]{0}', space=vmem, size = 0x2000, scoped, tag = 'input window, operand 3, single buffered']
    #allocation10 [shape = 's32[1]{0}', space=sflag, size = 0x4, scoped, tag = 'scoped memory for tpu_custom_call.1']
    #allocation11 [shape = 'u8[512]{0}', space=vmem, size = 0x400, scoped, tag = 'input window, operand 4, single buffered']
    #allocation12 [shape = 'u8[512]{0}', space=vmem, size = 0x400, scoped, tag = 'input window, operand 5, single buffered']
    #allocation13 [shape = 's32[1]{0}', space=sflag, size = 0x4, scoped, tag = 'scoped memory for tpu_custom_call.1']
    #allocation14 [shape = 'u8[512]{0}', space=vmem, size = 0x400, scoped, tag = 'output window, operand 0, single buffered']
    %13 = vsyncpa [#allocation4], 0
    %14 = vsyncpa [#allocation7], 0
    %15 = vsyncpa [#allocation10], 0
    %16 = vsyncpa [#allocation13], 0
    %17 = vsyncpa [#allocation5], 0
    // Predicated region
    $region2: #{tpu_custom_call.1} parent=1 // pred_check
      _
    $region3: #{tpu_custom_call.1} parent=1 // pred_check_branch
      %19 = sbr.rel (0) target = $region5
    $region4: #{tpu_custom_call.1} parent=1 // pred_region
      %s21 = ssub.s32 128, 128
      %22 = vsyncadd [#allocation4], %s21
      %s24 = sshll.u32 [#allocation3], 4
      %s25 = int_to_ptr.vmem [resolvable:$true] %s24
      %27 = dma.hbm_to_vmem [thread:$0]  %s0, 128, %s25, [#allocation4]
    $region5: #{tpu_custom_call.1} parent=1 // pred_fallthru
      _
    // Predicated region
    $region6: #{tpu_custom_call.1} parent=1 // pred_check
      _
    $region7: #{tpu_custom_call.1} parent=1 // pred_check_branch
      %29 = sbr.rel (0) target = $region9
    $region8: #{tpu_custom_call.1} parent=1 // pred_region
      %s31 = ssub.s32 128, 128
      %32 = vsyncadd [#allocation7], %s31
      %s33 = sshll.u32 [#allocation6], 4
      %s34 = int_to_ptr.vmem [resolvable:$true] %s33
      %39 = dma.hbm_to_vmem [thread:$0]  %s1, 128, %s34, [#allocation7], 64, 64, 4
    $region9: #{tpu_custom_call.1} parent=1 // pred_fallthru
      _
    // Predicated region
    $region10: #{tpu_custom_call.1} parent=1 // pred_check
      _
    $region11: #{tpu_custom_call.1} parent=1 // pred_check_branch
      %41 = sbr.rel (0) target = $region13
    $region12: #{tpu_custom_call.1} parent=1 // pred_region
      %s43 = ssub.s32 16, 16
      %44 = vsyncadd [#allocation7], %s43
      %s46 = sshll.u32 [#allocation8], 4
      %s47 = int_to_ptr.vmem [resolvable:$true] %s46
      %49 = dma.hbm_to_vmem [thread:$0]  %s2, 16, %s47, [#allocation7]
    $region13: #{tpu_custom_call.1} parent=1 // pred_fallthru
      _
    // Predicated region
    $region14: #{tpu_custom_call.1} parent=1 // pred_check
      _
    $region15: #{tpu_custom_call.1} parent=1 // pred_check_branch
      %51 = sbr.rel (0) target = $region17
    $region16: #{tpu_custom_call.1} parent=1 // pred_region
      %s53 = ssub.s32 256, 256
      %54 = vsyncadd [#allocation10], %s53
      %s55 = sshll.u32 [#allocation9], 4
      %s56 = int_to_ptr.vmem [resolvable:$true] %s55
      %61 = dma.hbm_to_vmem [thread:$0]  %s3, 256, %s56, [#allocation10], 64, 64, 4
    $region17: #{tpu_custom_call.1} parent=1 // pred_fallthru
      _
    // Predicated region
    $region18: #{tpu_custom_call.1} parent=1 // pred_check
      _
    $region19: #{tpu_custom_call.1} parent=1 // pred_check_branch
      %63 = sbr.rel (0) target = $region21
    $region20: #{tpu_custom_call.1} parent=1 // pred_region
      %s65 = ssub.s32 16, 16
      %66 = vsyncadd [#allocation10], %s65
      %s68 = sshll.u32 [#allocation11], 4
      %s69 = int_to_ptr.vmem [resolvable:$true] %s68
      %71 = dma.hbm_to_vmem [thread:$0]  %s4, 16, %s69, [#allocation10]
    $region21: #{tpu_custom_call.1} parent=1 // pred_fallthru
      _
    // Predicated region
    $region22: #{tpu_custom_call.1} parent=1 // pred_check
      _
    $region23: #{tpu_custom_call.1} parent=1 // pred_check_branch
      %73 = sbr.rel (0) target = $region25
    $region24: #{tpu_custom_call.1} parent=1 // pred_region
      %s75 = ssub.s32 16, 16
      %76 = vsyncadd [#allocation13], %s75
      %s78 = sshll.u32 [#allocation12], 4
      %s79 = int_to_ptr.vmem [resolvable:$true] %s78
      %81 = dma.hbm_to_vmem [thread:$0]  %s5, 16, %s79, [#allocation13]
    $region25: #{tpu_custom_call.1} parent=1 // pred_fallthru
      _
    // Predicated region
    $region26: #{tpu_custom_call.1} parent=1 // pred_check
      _
    $region27: #{tpu_custom_call.1} parent=1 // pred_check_branch
      %83 = sbr.rel (0) target = $region29
    $region28: #{tpu_custom_call.1} parent=1 // pred_region
      _
    $region29: #{tpu_custom_call.1} parent=1 // pred_fallthru
      _
    // Predicated region
    $region30: #{tpu_custom_call.1} parent=1 // pred_check
      _
    $region31: #{tpu_custom_call.1} parent=1 // pred_check_branch
      %85 = sbr.rel (0) target = $region33
    $region32: #{tpu_custom_call.1} parent=1 // pred_region
      %86 = dma.done [#allocation4], 128
    $region33: #{tpu_custom_call.1} parent=1 // pred_fallthru
      _
    // Predicated region
    $region34: #{tpu_custom_call.1} parent=1 // pred_check
      _
    $region35: #{tpu_custom_call.1} parent=1 // pred_check_branch
      %88 = sbr.rel (0) target = $region37
    $region36: #{tpu_custom_call.1} parent=1 // pred_region
      %89 = dma.done [#allocation7], 128
    $region37: #{tpu_custom_call.1} parent=1 // pred_fallthru
      _
    // Predicated region
    $region38: #{tpu_custom_call.1} parent=1 // pred_check
      _
    $region39: #{tpu_custom_call.1} parent=1 // pred_check_branch
      %91 = sbr.rel (0) target = $region41
    $region40: #{tpu_custom_call.1} parent=1 // pred_region
      %92 = dma.done [#allocation7], 16
    $region41: #{tpu_custom_call.1} parent=1 // pred_fallthru
      _
    // Predicated region
    $region42: #{tpu_custom_call.1} parent=1 // pred_check
      _
    $region43: #{tpu_custom_call.1} parent=1 // pred_check_branch
      %94 = sbr.rel (0) target = $region45
    $region44: #{tpu_custom_call.1} parent=1 // pred_region
      %95 = dma.done [#allocation10], 256
    $region45: #{tpu_custom_call.1} parent=1 // pred_fallthru
      _
    // Predicated region
    $region46: #{tpu_custom_call.1} parent=1 // pred_check
      _
    $region47: #{tpu_custom_call.1} parent=1 // pred_check_branch
      %97 = sbr.rel (0) target = $region49
    $region48: #{tpu_custom_call.1} parent=1 // pred_region
      %98 = dma.done [#allocation10], 16
    $region49: #{tpu_custom_call.1} parent=1 // pred_fallthru
      _
    // Predicated region
    $region50: #{tpu_custom_call.1} parent=1 // pred_check
      _
    $region51: #{tpu_custom_call.1} parent=1 // pred_check_branch
      %100 = sbr.rel (0) target = $region53
    $region52: #{tpu_custom_call.1} parent=1 // pred_region
      %101 = dma.done [#allocation13], 16
    $region53: #{tpu_custom_call.1} parent=1 // pred_fallthru
      _
    %v103 = vld [vmem:[#allocation3] sm:$0xff]
    %v104 = vpack.c.bf16 %v103, %v103
    %v105 = vld [vmem:[#allocation6] sm:$0xf]
    %v106 = vld [vmem:[#allocation6 + $0x4] sm:$0xf]
    %v107 = vld [vmem:[#allocation8] sm:$0x1]
    %v109 = vlaneseq
    %v110 = vshrl.u32 %v109, 7
    %v111 = vsub.s32 0, %v110
    %v112 = vrot.slane %v107, %v111
    %v116 = vunpack.c.l.b16 %v105
    %v117 = vunpack.c.l.b16 %v106
    %v118 = vpack.c.b16 %v117, %v116
    %vm120 = vcmask 130048
    %v122 = vsel %vm120, %v104, 0
    %124 = vmatprep.subr.bf16.mxu0 0
    %125 = vmatpush1.bf16.msra.mxu0 %v118
    %126 = vmatprep.subr.bf16.mxu0 0
    %127 = vmatpush1.bf16.msra.mxu0 0
    %128 = vmatprep.subr.bf16.mxu0 0
    %129 = vmatpush1.bf16.msra.mxu0 0
    %130 = vmatprep.subr.bf16.mxu0 0
    %131 = vmatpush1.bf16.msra.mxu0 0
    %132 = vmatprep.subr.bf16.mxu0 0
    %133 = vmatpush1.bf16.msra.mxu0 0
    %134 = vmatprep.subr.bf16.mxu0 0
    %135 = vmatpush1.bf16.msra.mxu0 0
    %136 = vmatprep.subr.bf16.mxu0 0
    %137 = vmatpush1.bf16.msra.mxu0 0
    %138 = vmatprep.subr.bf16.mxu0 0
    %139 = vmatpush1.bf16.msra.mxu0 0
    %140 = vmatprep.subr.bf16.mxu0 0
    %141 = vmatpush1.bf16.msra.mxu0 0
    %142 = vmatprep.subr.bf16.mxu0 0
    %143 = vmatpush1.bf16.msra.mxu0 0
    %144 = vmatprep.subr.bf16.mxu0 0
    %145 = vmatpush1.bf16.msra.mxu0 0
    %146 = vmatprep.subr.bf16.mxu0 0
    %147 = vmatpush1.bf16.msra.mxu0 0
    %148 = vmatprep.subr.bf16.mxu0 0
    %149 = vmatpush1.bf16.msra.mxu0 0
    %150 = vmatprep.subr.bf16.mxu0 0
    %151 = vmatpush1.bf16.msra.mxu0 0
    %152 = vmatprep.subr.bf16.mxu0 0
    %153 = vmatpush1.bf16.msra.mxu0 0
    %154 = vmatprep.subr.bf16.mxu0 0
    %155 = vmatpush1.bf16.msra.mxu0 0
    %156 = vmatprep.mubr.bf16.mxu0 0
    %157 = vmatmul.mubr.bf16.gmra.mrb[0].mxu0 %v122
    %v158 = vpop.f32.mrb[0].mxu0
    %v159 = vadd.f32 %v112, %v158
    %v160 = vpop.f32.mrb[0].mxu0
    %v161 = vpop.f32.mrb[0].mxu0
    %v162 = vpop.f32.mrb[0].mxu0
    %163 = vdwg.mxu0
    %v164 = vmax.f32 %v159, 0.0
    %v165 = vpack.c.bf16 %v164, %v164
    %v166 = vld [vmem:[#allocation9] sm:$0xf]
    %v167 = vld [vmem:[#allocation9 + $0x4] sm:$0xf]
    %v168 = vld [vmem:[#allocation9 + $0x8] sm:$0xf]
    %v169 = vld [vmem:[#allocation9 + $0xc] sm:$0xf]
    %v170 = vld [vmem:[#allocation11] sm:$0x1]
    %v172 = vlaneseq
    %v173 = vshrl.u32 %v172, 7
    %v174 = vsub.s32 0, %v173
    %v175 = vrot.slane %v170, %v174
    %v181 = vunpack.c.l.b16 %v166
    %v182 = vunpack.c.l.b16 %v167
    %v183 = vunpack.c.l.b16 %v168
    %v184 = vunpack.c.l.b16 %v169
    %v185 = vpack.c.b16 %v182, %v181
    %v186 = vpack.c.b16 %v184, %v183
    %vm189 = vcmask 261120
    %v191 = vsel %vm189, %v165, 0
    %193 = vmatprep.subr.bf16.mxu0 0
    %194 = vmatpush1.bf16.msra.mxu0 %v185
    %195 = vmatprep.subr.bf16.mxu0 0
    %196 = vmatpush1.bf16.msra.mxu0 %v186
    %197 = vmatprep.subr.bf16.mxu0 0
    %198 = vmatpush1.bf16.msra.mxu0 0
    %199 = vmatprep.subr.bf16.mxu0 0
    %200 = vmatpush1.bf16.msra.mxu0 0
    %201 = vmatprep.subr.bf16.mxu0 0
    %202 = vmatpush1.bf16.msra.mxu0 0
    %203 = vmatprep.subr.bf16.mxu0 0
    %204 = vmatpush1.bf16.msra.mxu0 0
    %205 = vmatprep.subr.bf16.mxu0 0
    %206 = vmatpush1.bf16.msra.mxu0 0
    %207 = vmatprep.subr.bf16.mxu0 0
    %208 = vmatpush1.bf16.msra.mxu0 0
    %209 = vmatprep.subr.bf16.mxu0 0
    %210 = vmatpush1.bf16.msra.mxu0 0
    %211 = vmatprep.subr.bf16.mxu0 0
    %212 = vmatpush1.bf16.msra.mxu0 0
    %213 = vmatprep.subr.bf16.mxu0 0
    %214 = vmatpush1.bf16.msra.mxu0 0
    %215 = vmatprep.subr.bf16.mxu0 0
    %216 = vmatpush1.bf16.msra.mxu0 0
    %217 = vmatprep.subr.bf16.mxu0 0
    %218 = vmatpush1.bf16.msra.mxu0 0
    %219 = vmatprep.subr.bf16.mxu0 0
    %220 = vmatpush1.bf16.msra.mxu0 0
    %221 = vmatprep.subr.bf16.mxu0 0
    %222 = vmatpush1.bf16.msra.mxu0 0
    %223 = vmatprep.subr.bf16.mxu0 0
    %224 = vmatpush1.bf16.msra.mxu0 0
    %225 = vmatprep.mubr.bf16.mxu0 0
    %226 = vmatmul.mubr.bf16.gmra.mrb[0].mxu0 %v191
    %v227 = vpop.f32.mrb[0].mxu0
    %v228 = vadd.f32 %v175, %v227
    %v229 = vpop.f32.mrb[0].mxu0
    %v230 = vpop.f32.mrb[0].mxu0
    %v231 = vpop.f32.mrb[0].mxu0
    %232 = vdwg.mxu0
    %v233 = vmax.f32 %v228, 0.0
    %v234 = vld [vmem:[#allocation12] sm:$0x1]
    %v236 = vlaneseq
    %v237 = vshrl.u32 %v236, 7
    %v238 = vsub.s32 0, %v237
    %v239 = vrot.slane %v234, %v238
    %v241 = vmul.f32 %v233, %v239
    %v242 = vsel %vm189, %v241, 0.0
    %243 = vadd.xlane.f32.xlu0 %v242
    %v244 = vpop.xlane.xlu0 %243
    %s245 = sld [smem:[#allocation2]]
    %v246 = vstv %s245
    %v247 = vadd.f32 %v244, %v246
    %v249 = vlaneseq
    %v250 = vand.u32 %v249, 127
    %v251 = vlaneseq
    %v252 = vshrl.u32 %v251, 7
    %v253 = vsub.s32 %v250, %v252
    %v254 = vrot.slane %v247, %v253
    %vm256 = vcmask 57344
    %257 = vst.msk [vmem:[#allocation14] sm:$0x1] %vm256, %v254
    // Predicated region
    $region54: #{tpu_custom_call.1} parent=1 // pred_check
      _
    $region55: #{tpu_custom_call.1} parent=1 // pred_check_branch
      %259 = sbr.rel (0) target = $region57
    $region56: #{tpu_custom_call.1} parent=1 // pred_region
      %s261 = ssub.s32 16, 16
      %262 = vsyncadd [#allocation5], %s261
      %s264 = sshll.u32 [#allocation14], 4
      %s265 = int_to_ptr.vmem [resolvable:$true] %s264
      %267 = dma.vmem_to_hbm [thread:$0]  %s265, 16, %s7, [#allocation5]
    $region57: #{tpu_custom_call.1} parent=1 // pred_fallthru
      _
    // Predicated region
    $region58: #{tpu_custom_call.1} parent=1 // pred_check
      _
    $region59: #{tpu_custom_call.1} parent=1 // pred_check_branch
      %269 = sbr.rel (0) target = $region61
    $region60: #{tpu_custom_call.1} parent=1 // pred_region
      %270 = dma.done [#allocation5], 16
    $region61: #{tpu_custom_call.1} parent=1 // pred_fallthru
      _
    %271 = vsyncpa [#allocation4], 1
    %272 = vsyncpa [#allocation7], 1
    %273 = vsyncpa [#allocation10], 1
    %274 = vsyncpa [#allocation13], 1
    %275 = vsyncpa [#allocation5], 1

</llo_original>
